<compile_context>
chip_gen: v7x
topology: tpu7x:2x2x1
jax: 0.10.0
libtpu: 0.0.40
codegen_flags: <defaults>
</compile_context>

<pallas_src>
import functools

import jax
import jax.numpy as jnp
from jax.experimental import pallas as pl
from jax.experimental.pallas import tpu as pltpu

_NEG_BIG = jnp.float32(-1e30)  # effectively -inf for padded softmax lanes


def _round_up(a: int, m: int) -> int:
    return ((a + m - 1) // m) * m


def _geom_d(d: int):
    """Contraction tile and padded contraction extent for feature dim d."""
    tk = min(_round_up(max(d, 1), 128), 2048)
    d_pad = _round_up(d, tk)
    return tk, d_pad


def prepare_params(w, b):
    """One-time parameter prep: pad + cast W to bf16, pad bias with -1e30.

    w: (D, K) f32, b: (K,) f32  ->  wp: (D_pad, K_pad) bf16, bp: (1, K_pad) f32
    """
    d, k = w.shape
    _, d_pad = _geom_d(d)
    k_pad = _round_up(max(k, 1), 128)
    wp = jnp.zeros((d_pad, k_pad), jnp.bfloat16)
    wp = wp.at[:d, :k].set(w.astype(jnp.bfloat16))          # padded cols stay 0
    bp = jnp.full((1, k_pad), _NEG_BIG, jnp.float32)
    bp = bp.at[0, :k].set(b.astype(jnp.float32))             # padded lanes -1e30
    return wp, bp


def _linear_softmax_kernel(x_ref, w_ref, b_ref, o_ref, acc_ref, *, tk):
    """One (row-tile, contraction-tile) grid step.

    x_ref:  (TM, TK)        f32  (cast to bf16 in-kernel for the MXU)
    w_ref:  (D_pad, K_pad)  bf16 (fully VMEM-resident, sliced with pl.ds)
    b_ref:  (1, K_pad)      f32  (padded lanes hold -1e30)
    o_ref:  (TM, K_pad)     f32
    acc_ref:(TM, K_pad)     f32 VMEM scratch (logits accumulator / workspace)
    """
    kk = pl.program_id(1)

    @pl.when(kk == 0)
    def _():
        acc_ref[...] = jnp.zeros_like(acc_ref)

    row0 = pl.multiple_of(kk * tk, tk)
    w_tile = w_ref[pl.ds(row0, tk), :]
    acc_ref[...] += jnp.dot(x_ref[...].astype(jnp.bfloat16), w_tile,
                            preferred_element_type=jnp.float32)

    @pl.when(kk == pl.num_programs(1) - 1)
    def _():
        # Reuse acc_ref as the epilogue workspace (no extra f32 temporaries).
        acc_ref[...] += b_ref[...]                              # padded lanes -> -1e30
        m = jnp.max(acc_ref[...], axis=-1, keepdims=True)       # max over real lanes
        acc_ref[...] = jnp.exp(acc_ref[...] - m)                # padded lanes -> 0
        denom = jnp.sum(acc_ref[...], axis=-1, keepdims=True)
        o_ref[...] = acc_ref[...] * pl.reciprocal(denom, approx=True)


def model_with_softmax(x_nchw, wp, bp, k_out):
    """x_nchw: (N, C, H, W) f32; wp/bp from prepare_params -> (N, k_out) f32."""
    n = x_nchw.shape[0]
    d = 1
    for s in x_nchw.shape[1:]:
        d *= s

    # ---- flatten (row-major, matches torch .view) ------------------------
    x_flat = x_nchw.reshape(n, d)                     # stays f32; cast in-kernel

    # ---- tiled geometry ---------------------------------------------------
    tk, d_pad = _geom_d(d)
    k_pad = wp.shape[1]
    assert wp.shape[0] == d_pad

    tm = min(_round_up(max(n, 1), 16), 512)           # bf16 sublane pack = 16 rows
    n_pad = _round_up(n, tm)
    # v7x megacore: ensure >=2 row blocks when there is enough work to split.
    if n_pad // tm == 1 and n_pad >= 32:
        tm = _round_up(max(n_pad // 2, 16), 16)
        n_pad = _round_up(n, tm)

    pad_n, pad_d = n_pad - n, d_pad - d
    if pad_n or pad_d:
        x_flat = jnp.pad(x_flat, ((0, pad_n), (0, pad_d)))

    grid = (n_pad // tm, d_pad // tk)

    # ---- VMEM budget (resident W + double-buffered tiles), v7x-safe cap ----
    vmem_bytes = (
        2 * d_pad * k_pad * 2        # resident W (bf16), allow double buffer
        + 2 * tm * tk * 4            # x f32 tiles, double-buffered
        + 2 * tm * k_pad * 4         # output tiles, double-buffered
        + tm * k_pad * 4             # f32 accumulator scratch
        + 2 * k_pad * 4              # bias
    )
    vmem_limit = int(min(max(vmem_bytes + (4 << 20), 16 << 20), 48 << 20))

    kernel = functools.partial(_linear_softmax_kernel, tk=tk)

    out_padded = pl.pallas_call(
        kernel,
        out_shape=jax.ShapeDtypeStruct((n_pad, k_pad), jnp.float32),
        grid=grid,
        in_specs=[
            pl.BlockSpec((tm, tk), lambda i, kk: (i, kk)),        # x stream
            pl.BlockSpec((d_pad, k_pad), lambda i, kk: (0, 0)),   # W resident
            pl.BlockSpec((1, k_pad), lambda i, kk: (0, 0)),       # bias resident
        ],
        out_specs=pl.BlockSpec((tm, k_pad), lambda i, kk: (i, 0)),
        scratch_shapes=[pltpu.VMEM((tm, k_pad), jnp.float32)],
        compiler_params=pltpu.CompilerParams(
            dimension_semantics=("parallel", "arbitrary"),
            vmem_limit_bytes=vmem_limit),
    )(x_flat, wp, bp)

    return out_padded[:n, :k_out]


if __name__ == "__main__":
    # Small shapes consistent with the module: NCHW image input, K classes.
    N, C, H, W = 2, 4, 16, 16
    K = 8
    D = C * H * W

    key = jax.random.PRNGKey(0)
    kx, kw, kb = jax.random.split(key, 3)
    x = jax.random.normal(kx, (N, C, H, W), dtype=jnp.float32)
    # Deterministic synthetic parameters for the wrapped "model"
    # (flatten + Linear(D, K)); not loaded from any checkpoint.
    # TODO(synk): the wrapped `model` is injected at construction time in the
    # original module; a flatten+Linear stand-in is used here.
    w = jax.random.normal(kw, (D, K), dtype=jnp.float32) * 0.02
    b = jax.random.normal(kb, (K,), dtype=jnp.float32) * 0.1

    wp, bp = prepare_params(w, b)          # one-time parameter prep
    out = model_with_softmax(x, wp, bp, K)
    out = jax.block_until_ready(out)

    # Pure-JAX reference with the same bf16 operand rounding as the kernel.
    x_ref = x.reshape(N, D).astype(jnp.bfloat16).astype(jnp.float32)
    w_ref = w.astype(jnp.bfloat16).astype(jnp.float32)
    ref = jax.nn.softmax(x_ref @ w_ref + b, axis=1)

    assert out.shape == (N, K)
    assert jnp.allclose(out, ref, atol=2e-3, rtol=2e-3)
    assert jnp.allclose(jnp.sum(out, axis=1), 1.0, atol=2e-3)

    print("KERNEL_OK")
</pallas_src>

<mosaic_0001>
module attributes {stable_mosaic.version = 11 : i64} {
  func.func @_linear_softmax_kernel(%arg0: i32, %arg1: i32, %arg2: memref<16x1024xf32, #tpu.memory_space<vmem>>, %arg3: memref<1024x128xbf16, #tpu.memory_space<vmem>>, %arg4: memref<1x128xf32, #tpu.memory_space<vmem>>, %arg5: memref<16x128xf32, #tpu.memory_space<vmem>>, %arg6: memref<16x128xf32, #tpu.memory_space<vmem>>) attributes {dimension_semantics = [#tpu.dimension_semantics<parallel>, #tpu.dimension_semantics<arbitrary>], iteration_bounds = array<i64: 1, 1>, scalar_prefetch = 0 : i64, scratch_operands = 1 : i64, tpu.core_type = #tpu.core_type<tc>, window_params = [{transform_indices = @transform_0, window_bounds = array<i64: 16, 1024>}, {pipeline_mode = #tpu.pipeline_mode<synchronous>, transform_indices = @transform_1, window_bounds = array<i64: 1024, 128>}, {pipeline_mode = #tpu.pipeline_mode<synchronous>, transform_indices = @transform_2, window_bounds = array<i64: 1, 128>}, {transform_indices = @transform_3, window_bounds = array<i64: 16, 128>}]} {
    %c0_i32 = arith.constant 0 : i32
    %0 = arith.cmpi eq, %arg1, %c0_i32 : i32
    %1 = arith.extui %0 : i1 to i32
    %c0_i32_0 = arith.constant 0 : i32
    %2 = arith.cmpi ne, %1, %c0_i32_0 : i32
    scf.if %2 {
      %cst_9 = arith.constant 0.000000e+00 : f32
      %16 = vector.broadcast %cst_9 : f32 to vector<16x128xf32>
      %c0_10 = arith.constant 0 : index
      %c0_11 = arith.constant 0 : index
      %17 = vector.load %arg6[%c0_10, %c0_11] : memref<16x128xf32, #tpu.memory_space<vmem>>, vector<16x128xf32>
      tpu.vector_store %arg6[%c0_10, %c0_11], %16 {strides = array<i32>} : memref<16x128xf32, #tpu.memory_space<vmem>>, vector<16x128xf32>,
    } else {
    }
    %c1024_i32 = arith.constant 1024 : i32
    %3 = arith.muli %arg1, %c1024_i32 : i32
    %4 = tpu.assume_multiple %3, 1024 : i32
    %5 = arith.index_cast %4 : i32 to index
    %c0 = arith.constant 0 : index
    %6 = vector.load %arg3[%5, %c0] : memref<1024x128xbf16, #tpu.memory_space<vmem>>, vector<1024x128xbf16>
    %c0_1 = arith.constant 0 : index
    %c0_2 = arith.constant 0 : index
    %7 = vector.load %arg6[%c0_1, %c0_2] : memref<16x128xf32, #tpu.memory_space<vmem>>, vector<16x128xf32>
    %c0_3 = arith.constant 0 : index
    %c0_4 = arith.constant 0 : index
    %8 = vector.load %arg2[%c0_3, %c0_4] : memref<16x1024xf32, #tpu.memory_space<vmem>>, vector<16x1024xf32>
    %9 = arith.truncf %8 : vector<16x1024xf32> to vector<16x1024xbf16>
    %cst = arith.constant dense<0.000000e+00> : vector<16x128xf32>
    %10 = tpu.matmul %9, %6, %cst {dimension_numbers = #tpu.dot_dimension_numbers<[1], [0], [0], [1], [0, 0, 1, 1], [], []>} : vector<16x1024xbf16>, vector<1024x128xbf16>, vector<16x128xf32> -> vector<16x128xf32>
    %11 = arith.addf %7, %10 : vector<16x128xf32>
    %c0_5 = arith.constant 0 : index
    %c0_6 = arith.constant 0 : index
    %12 = vector.load %arg6[%c0_5, %c0_6] : memref<16x128xf32, #tpu.memory_space<vmem>>, vector<16x128xf32>
    tpu.vector_store %arg6[%c0_5, %c0_6], %11 {strides = array<i32>} : memref<16x128xf32, #tpu.memory_space<vmem>>, vector<16x128xf32>,
    %c0_i32_7 = arith.constant 0 : i32
    %13 = arith.cmpi eq, %arg1, %c0_i32_7 : i32
    %14 = arith.extui %13 : i1 to i32
    %c0_i32_8 = arith.constant 0 : i32
    %15 = arith.cmpi ne, %14, %c0_i32_8 : i32
    scf.if %15 {
      %c0_9 = arith.constant 0 : index
      %c0_10 = arith.constant 0 : index
      %16 = vector.load %arg6[%c0_9, %c0_10] : memref<16x128xf32, #tpu.memory_space<vmem>>, vector<16x128xf32>
      %c0_11 = arith.constant 0 : index
      %c0_12 = arith.constant 0 : index
      %17 = vector.load %arg4[%c0_11, %c0_12] : memref<1x128xf32, #tpu.memory_space<vmem>>, vector<1x128xf32>
      %18 = vector.broadcast %17 : vector<1x128xf32> to vector<16x128xf32>
      %19 = arith.addf %16, %18 : vector<16x128xf32>
      %c0_13 = arith.constant 0 : index
      %c0_14 = arith.constant 0 : index
      %20 = vector.load %arg6[%c0_13, %c0_14] : memref<16x128xf32, #tpu.memory_space<vmem>>, vector<16x128xf32>
      tpu.vector_store %arg6[%c0_13, %c0_14], %19 {strides = array<i32>} : memref<16x128xf32, #tpu.memory_space<vmem>>, vector<16x128xf32>,
      %c0_15 = arith.constant 0 : index
      %c0_16 = arith.constant 0 : index
      %21 = vector.load %arg6[%c0_15, %c0_16] : memref<16x128xf32, #tpu.memory_space<vmem>>, vector<16x128xf32>
      %cst_17 = arith.constant dense<0xFF800000> : vector<16xf32>
      %22 = vector.multi_reduction <maximumf>, %21, %cst_17 [1] : vector<16x128xf32> to vector<16xf32>
      %23 = vector.shape_cast %22 : vector<16xf32> to vector<16x1xf32>
      %c0_18 = arith.constant 0 : index
      %c0_19 = arith.constant 0 : index
      %24 = vector.load %arg6[%c0_18, %c0_19] : memref<16x128xf32, #tpu.memory_space<vmem>>, vector<16x128xf32>
      %25 = vector.broadcast %23 : vector<16x1xf32> to vector<16x128xf32>
      %26 = arith.subf %24, %25 : vector<16x128xf32>
      %27 = math.exp %26 : vector<16x128xf32>
      %c0_20 = arith.constant 0 : index
      %c0_21 = arith.constant 0 : index
      %28 = vector.load %arg6[%c0_20, %c0_21] : memref<16x128xf32, #tpu.memory_space<vmem>>, vector<16x128xf32>
      tpu.vector_store %arg6[%c0_20, %c0_21], %27 {strides = array<i32>} : memref<16x128xf32, #tpu.memory_space<vmem>>, vector<16x128xf32>,
      %c0_22 = arith.constant 0 : index
      %c0_23 = arith.constant 0 : index
      %29 = vector.load %arg6[%c0_22, %c0_23] : memref<16x128xf32, #tpu.memory_space<vmem>>, vector<16x128xf32>
      %cst_24 = arith.constant dense<0.000000e+00> : vector<16xf32>
      %30 = vector.multi_reduction <add>, %29, %cst_24 [1] : vector<16x128xf32> to vector<16xf32>
      %31 = vector.shape_cast %30 : vector<16xf32> to vector<16x1xf32>
      %c0_25 = arith.constant 0 : index
      %c0_26 = arith.constant 0 : index
      %32 = vector.load %arg6[%c0_25, %c0_26] : memref<16x128xf32, #tpu.memory_space<vmem>>, vector<16x128xf32>
      %33 = tpu.reciprocal %31 {approx = true} : vector<16x1xf32> -> vector<16x1xf32>
      %34 = vector.broadcast %33 : vector<16x1xf32> to vector<16x128xf32>
      %35 = arith.mulf %32, %34 : vector<16x128xf32>
      %c0_27 = arith.constant 0 : index
      %c0_28 = arith.constant 0 : index
      %36 = vector.load %arg5[%c0_27, %c0_28] : memref<16x128xf32, #tpu.memory_space<vmem>>, vector<16x128xf32>
      tpu.vector_store %arg5[%c0_27, %c0_28], %35 {strides = array<i32>} : memref<16x128xf32, #tpu.memory_space<vmem>>, vector<16x128xf32>,
    } else {
    }
    return
  }
  func.func @transform_0(%arg0: i32, %arg1: i32) -> (i32, i32) {
    %c0_i32 = arith.constant 0 : i32
    return %arg0, %arg1 : i32, i32
  }
  func.func @transform_1(%arg0: i32, %arg1: i32) -> (i32, i32) {
    %c0_i32 = arith.constant 0 : i32
    %c0_i32_0 = arith.constant 0 : i32
    %c0_i32_1 = arith.constant 0 : i32
    return %c0_i32, %c0_i32_0 : i32, i32
  }
  func.func @transform_2(%arg0: i32, %arg1: i32) -> (i32, i32) {
    %c0_i32 = arith.constant 0 : i32
    %c0_i32_0 = arith.constant 0 : i32
    %c0_i32_1 = arith.constant 0 : i32
    return %c0_i32, %c0_i32_0 : i32, i32
  }
  func.func @transform_3(%arg0: i32, %arg1: i32) -> (i32, i32) {
    %c0_i32 = arith.constant 0 : i32
    %c0_i32_0 = arith.constant 0 : i32
    return %arg0, %c0_i32 : i32, i32
  }
}

</mosaic_0001>

<llo_original>
// kernel: tpu_custom_call.1
$region0: #{tpu_custom_call.1}
  #allocation0 [shape = 'u32[]', space=smem, size = 0x4, offset = 0x4, fixed_abs, tag = 'smem constant byte address 0x4 - core index']
  #allocation1 [shape = 'u32[144,128]{1,0:T(1,128)}', space=vmem, size = 0x12000, scoped, tag = 'internal scratch']
  #allocation2 [shape = 'f32[16,128]{1,0:T(8,128)}', space=vmem, size = 0x2000, scoped, tag = 'scratch operand']
  %s0 = inlined_call_operand.hbm [shape: f32[16,1024], index: 0, kind: input, shape index: {}]
  %s1 = inlined_call_operand.hbm [shape: bf16[1024,128], index: 1, kind: input, shape index: {}]
  %s2 = inlined_call_operand.vmem [shape: f32[1,128], index: 2, kind: input, shape index: {}]
  %s3 = inlined_call_operand.hbm [shape: f32[16,128], index: 3, kind: output, shape index: {}]
  %s4 = sld [smem:[#allocation0]]
  $region38: #{tpu_custom_call.1} parent=0
    _
  %s6 = ssub.s32 1, %s4
  %s7 = scalar_select 0, %s6, %s4
  $region1: #{tpu_custom_call.1} parent=0
    #allocation3 [shape = 'u8[65536]{0}', space=vmem, size = 0x10000, scoped, tag = 'input window, operand 0, single buffered']
    #allocation4 [shape = 's32[1]{0}', space=sflag, size = 0x4, scoped, tag = 'scoped memory for tpu_custom_call.1']
    #allocation5 [shape = 's32[1]{0}', space=sflag, size = 0x4, scoped, tag = 'scoped memory for tpu_custom_call.1']
    #allocation6 [shape = 'u8[262144]{0}', space=vmem, size = 0x40000, scoped, tag = 'input window, operand 1, single buffered']
    #allocation7 [shape = 's32[1]{0}', space=sflag, size = 0x4, scoped, tag = 'scoped memory for tpu_custom_call.1']
    #allocation8 [shape = 'u8[8192]{0}', space=vmem, size = 0x2000, scoped, tag = 'output window, operand 0, single buffered']
    %8 = vsyncpa [#allocation4], 0
    %9 = vsyncpa [#allocation7], 0
    %10 = vsyncpa [#allocation5], 0
    // Predicated region
    $region2: #{tpu_custom_call.1} parent=1 // pred_check
      _
    $region3: #{tpu_custom_call.1} parent=1 // pred_check_branch
      %12 = sbr.rel (0) target = $region5
    $region4: #{tpu_custom_call.1} parent=1 // pred_region
      %s14 = ssub.s32 2048, 2048
      %15 = vsyncadd [#allocation4], %s14
      %s16 = sshll.u32 [#allocation3], 4
      %s17 = int_to_ptr.vmem [resolvable:$true] %s16
      %22 = dma.hbm_to_vmem [thread:$0]  %s0, 2048, %s17, [#allocation4], 1024, 1024, 64
    $region5: #{tpu_custom_call.1} parent=1 // pred_fallthru
      _
    // Predicated region
    $region6: #{tpu_custom_call.1} parent=1 // pred_check
      _
    $region7: #{tpu_custom_call.1} parent=1 // pred_check_branch
      %24 = sbr.rel (0) target = $region9
    $region8: #{tpu_custom_call.1} parent=1 // pred_region
      %s26 = ssub.s32 8192, 8192
      %27 = vsyncadd [#allocation7], %s26
      %s28 = sshll.u32 [#allocation6], 4
      %s29 = int_to_ptr.vmem [resolvable:$true] %s28
      %34 = dma.hbm_to_vmem [thread:$0]  %s1, 8192, %s29, [#allocation7], 64, 64, 4
    $region9: #{tpu_custom_call.1} parent=1 // pred_fallthru
      _
    // Predicated region
    $region10: #{tpu_custom_call.1} parent=1 // pred_check
      _
    $region11: #{tpu_custom_call.1} parent=1 // pred_check_branch
      %36 = sbr.rel (0) target = $region13
    $region12: #{tpu_custom_call.1} parent=1 // pred_region
      _
    $region13: #{tpu_custom_call.1} parent=1 // pred_fallthru
      _
    // Predicated region
    $region14: #{tpu_custom_call.1} parent=1 // pred_check
      _
    $region15: #{tpu_custom_call.1} parent=1 // pred_check_branch
      %38 = sbr.rel (0) target = $region17
    $region16: #{tpu_custom_call.1} parent=1 // pred_region
      %39 = dma.done [#allocation4], 2048
    $region17: #{tpu_custom_call.1} parent=1 // pred_fallthru
      _
    // Predicated region
    $region18: #{tpu_custom_call.1} parent=1 // pred_check
      _
    $region19: #{tpu_custom_call.1} parent=1 // pred_check_branch
      %41 = sbr.rel (0) target = $region21
    $region20: #{tpu_custom_call.1} parent=1 // pred_region
      %42 = dma.done [#allocation7], 8192
    $region21: #{tpu_custom_call.1} parent=1 // pred_fallthru
      _
    %p44 = scmp.eq.s32.totalorder 0, 0
    // Predicated region
    $region22: #{tpu_custom_call.1} parent=1 // pred_check
      %p45 = pneg %p44
    $region23: #{tpu_custom_call.1} parent=1 // pred_check_branch
      %47 = sbr.rel (%p45) target = $region25
    $region24: #{tpu_custom_call.1} parent=1 // pred_region
      %48 = vst [vmem:[#allocation2] sm:$0xff] 0.0
      %49 = vst [vmem:[#allocation2 + $0x8] sm:$0xff] 0.0
    $region25: #{tpu_custom_call.1} parent=1 // pred_fallthru
      _
    %s50 = smul.u32 0, 1024
    %s51 = sshra.s32 %s50, 3
    %s52 = sand.u32 %s50, 7
    %s53 = smul.addr %s51, 4
    %s54 = scalar_lea.vmem [#allocation6], %s53
    %v55 = vld [vmem:[%s54] sm:$0xf]
    %v56 = vld [vmem:[%s54 + $0x4] sm:$0xf]
    %v57 = vld [vmem:[%s54 + $0x8] sm:$0xf]
    %v58 = vld [vmem:[%s54 + $0xc] sm:$0xf]
    %v59 = vld [vmem:[%s54 + $0x10] sm:$0xf]
    %v60 = vld [vmem:[%s54 + $0x14] sm:$0xf]
    %v61 = vld [vmem:[%s54 + $0x18] sm:$0xf]
    %v62 = vld [vmem:[%s54 + $0x1c] sm:$0xf]
    %v63 = vld [vmem:[%s54 + $0x20] sm:$0xf]
    %v64 = vld [vmem:[%s54 + $0x24] sm:$0xf]
    %v65 = vld [vmem:[%s54 + $0x28] sm:$0xf]
    %v66 = vld [vmem:[%s54 + $0x2c] sm:$0xf]
    %v67 = vld [vmem:[%s54 + $0x30] sm:$0xf]
    %v68 = vld [vmem:[%s54 + $0x34] sm:$0xf]
    %v69 = vld [vmem:[%s54 + $0x38] sm:$0xf]
    %v70 = vld [vmem:[%s54 + $0x3c] sm:$0xf]
    %v71 = vld [vmem:[%s54 + $0x40] sm:$0xf]
    %v72 = vld [vmem:[%s54 + $0x44] sm:$0xf]
    %v73 = vld [vmem:[%s54 + $0x48] sm:$0xf]
    %v74 = vld [vmem:[%s54 + $0x4c] sm:$0xf]
    %v75 = vld [vmem:[%s54 + $0x50] sm:$0xf]
    %v76 = vld [vmem:[%s54 + $0x54] sm:$0xf]
    %v77 = vld [vmem:[%s54 + $0x58] sm:$0xf]
    %v78 = vld [vmem:[%s54 + $0x5c] sm:$0xf]
    %v79 = vld [vmem:[%s54 + $0x60] sm:$0xf]
    %v80 = vld [vmem:[%s54 + $0x64] sm:$0xf]
    %v81 = vld [vmem:[%s54 + $0x68] sm:$0xf]
    %v82 = vld [vmem:[%s54 + $0x6c] sm:$0xf]
    %v83 = vld [vmem:[%s54 + $0x70] sm:$0xf]
    %v84 = vld [vmem:[%s54 + $0x74] sm:$0xf]
    %v85 = vld [vmem:[%s54 + $0x78] sm:$0xf]
    %v86 = vld [vmem:[%s54 + $0x7c] sm:$0xf]
    %v87 = vld [vmem:[%s54 + $0x80] sm:$0xf]
    %v88 = vld [vmem:[%s54 + $0x84] sm:$0xf]
    %v89 = vld [vmem:[%s54 + $0x88] sm:$0xf]
    %v90 = vld [vmem:[%s54 + $0x8c] sm:$0xf]
    %v91 = vld [vmem:[%s54 + $0x90] sm:$0xf]
    %v92 = vld [vmem:[%s54 + $0x94] sm:$0xf]
    %v93 = vld [vmem:[%s54 + $0x98] sm:$0xf]
    %v94 = vld [vmem:[%s54 + $0x9c] sm:$0xf]
    %v95 = vld [vmem:[%s54 + $0xa0] sm:$0xf]
    %v96 = vld [vmem:[%s54 + $0xa4] sm:$0xf]
    %v97 = vld [vmem:[%s54 + $0xa8] sm:$0xf]
    %v98 = vld [vmem:[%s54 + $0xac] sm:$0xf]
    %v99 = vld [vmem:[%s54 + $0xb0] sm:$0xf]
    %v100 = vld [vmem:[%s54 + $0xb4] sm:$0xf]
    %v101 = vld [vmem:[%s54 + $0xb8] sm:$0xf]
    %v102 = vld [vmem:[%s54 + $0xbc] sm:$0xf]
    %v103 = vld [vmem:[%s54 + $0xc0] sm:$0xf]
    %v104 = vld [vmem:[%s54 + $0xc4] sm:$0xf]
    %v105 = vld [vmem:[%s54 + $0xc8] sm:$0xf]
    %v106 = vld [vmem:[%s54 + $0xcc] sm:$0xf]
    %v107 = vld [vmem:[%s54 + $0xd0] sm:$0xf]
    %v108 = vld [vmem:[%s54 + $0xd4] sm:$0xf]
    %v109 = vld [vmem:[%s54 + $0xd8] sm:$0xf]
    %v110 = vld [vmem:[%s54 + $0xdc] sm:$0xf]
    %v111 = vld [vmem:[%s54 + $0xe0] sm:$0xf]
    %v112 = vld [vmem:[%s54 + $0xe4] sm:$0xf]
    %v113 = vld [vmem:[%s54 + $0xe8] sm:$0xf]
    %v114 = vld [vmem:[%s54 + $0xec] sm:$0xf]
    %v115 = vld [vmem:[%s54 + $0xf0] sm:$0xf]
    %v116 = vld [vmem:[%s54 + $0xf4] sm:$0xf]
    %v117 = vld [vmem:[%s54 + $0xf8] sm:$0xf]
    %v118 = vld [vmem:[%s54 + $0xfc] sm:$0xf]
    %v119 = vld [vmem:[%s54 + $0x100] sm:$0xf]
    %v120 = vld [vmem:[%s54 + $0x104] sm:$0xf]
    %v121 = vld [vmem:[%s54 + $0x108] sm:$0xf]
    %v122 = vld [vmem:[%s54 + $0x10c] sm:$0xf]
    %v123 = vld [vmem:[%s54 + $0x110] sm:$0xf]
    %v124 = vld [vmem:[%s54 + $0x114] sm:$0xf]
    %v125 = vld [vmem:[%s54 + $0x118] sm:$0xf]
    %v126 = vld [vmem:[%s54 + $0x11c] sm:$0xf]
    %v127 = vld [vmem:[%s54 + $0x120] sm:$0xf]
    %v128 = vld [vmem:[%s54 + $0x124] sm:$0xf]
    %v129 = vld [vmem:[%s54 + $0x128] sm:$0xf]
    %v130 = vld [vmem:[%s54 + $0x12c] sm:$0xf]
    %v131 = vld [vmem:[%s54 + $0x130] sm:$0xf]
    %v132 = vld [vmem:[%s54 + $0x134] sm:$0xf]
    %v133 = vld [vmem:[%s54 + $0x138] sm:$0xf]
    %v134 = vld [vmem:[%s54 + $0x13c] sm:$0xf]
    %v135 = vld [vmem:[%s54 + $0x140] sm:$0xf]
    %v136 = vld [vmem:[%s54 + $0x144] sm:$0xf]
    %v137 = vld [vmem:[%s54 + $0x148] sm:$0xf]
    %v138 = vld [vmem:[%s54 + $0x14c] sm:$0xf]
    %v139 = vld [vmem:[%s54 + $0x150] sm:$0xf]
    %v140 = vld [vmem:[%s54 + $0x154] sm:$0xf]
    %v141 = vld [vmem:[%s54 + $0x158] sm:$0xf]
    %v142 = vld [vmem:[%s54 + $0x15c] sm:$0xf]
    %v143 = vld [vmem:[%s54 + $0x160] sm:$0xf]
    %v144 = vld [vmem:[%s54 + $0x164] sm:$0xf]
    %v145 = vld [vmem:[%s54 + $0x168] sm:$0xf]
    %v146 = vld [vmem:[%s54 + $0x16c] sm:$0xf]
    %v147 = vld [vmem:[%s54 + $0x170] sm:$0xf]
    %v148 = vld [vmem:[%s54 + $0x174] sm:$0xf]
    %v149 = vld [vmem:[%s54 + $0x178] sm:$0xf]
    %v150 = vld [vmem:[%s54 + $0x17c] sm:$0xf]
    %v151 = vld [vmem:[%s54 + $0x180] sm:$0xf]
    %v152 = vld [vmem:[%s54 + $0x184] sm:$0xf]
    %v153 = vld [vmem:[%s54 + $0x188] sm:$0xf]
    %v154 = vld [vmem:[%s54 + $0x18c] sm:$0xf]
    %v155 = vld [vmem:[%s54 + $0x190] sm:$0xf]
    %v156 = vld [vmem:[%s54 + $0x194] sm:$0xf]
    %v157 = vld [vmem:[%s54 + $0x198] sm:$0xf]
    %v158 = vld [vmem:[%s54 + $0x19c] sm:$0xf]
    %v159 = vld [vmem:[%s54 + $0x1a0] sm:$0xf]
    %v160 = vld [vmem:[%s54 + $0x1a4] sm:$0xf]
    %v161 = vld [vmem:[%s54 + $0x1a8] sm:$0xf]
    %v162 = vld [vmem:[%s54 + $0x1ac] sm:$0xf]
    %v163 = vld [vmem:[%s54 + $0x1b0] sm:$0xf]
    %v164 = vld [vmem:[%s54 + $0x1b4] sm:$0xf]
    %v165 = vld [vmem:[%s54 + $0x1b8] sm:$0xf]
    %v166 = vld [vmem:[%s54 + $0x1bc] sm:$0xf]
    %v167 = vld [vmem:[%s54 + $0x1c0] sm:$0xf]
    %v168 = vld [vmem:[%s54 + $0x1c4] sm:$0xf]
    %v169 = vld [vmem:[%s54 + $0x1c8] sm:$0xf]
    %v170 = vld [vmem:[%s54 + $0x1cc] sm:$0xf]
    %v171 = vld [vmem:[%s54 + $0x1d0] sm:$0xf]
    %v172 = vld [vmem:[%s54 + $0x1d4] sm:$0xf]
    %v173 = vld [vmem:[%s54 + $0x1d8] sm:$0xf]
    %v174 = vld [vmem:[%s54 + $0x1dc] sm:$0xf]
    %v175 = vld [vmem:[%s54 + $0x1e0] sm:$0xf]
    %v176 = vld [vmem:[%s54 + $0x1e4] sm:$0xf]
    %v177 = vld [vmem:[%s54 + $0x1e8] sm:$0xf]
    %v178 = vld [vmem:[%s54 + $0x1ec] sm:$0xf]
    %v179 = vld [vmem:[%s54 + $0x1f0] sm:$0xf]
    %v180 = vld [vmem:[%s54 + $0x1f4] sm:$0xf]
    %v181 = vld [vmem:[%s54 + $0x1f8] sm:$0xf]
    %v182 = vld [vmem:[%s54 + $0x1fc] sm:$0xf]
    %v183 = vld [vmem:[#allocation2] sm:$0xff]
    %v184 = vld [vmem:[#allocation2 + $0x8] sm:$0xff]
    %v185 = vld [vmem:[#allocation3] sm:$0xff]
    %v186 = vld [vmem:[#allocation3 + $0x8] sm:$0xff]
    %v187 = vld [vmem:[#allocation3 + $0x10] sm:$0xff]
    %v188 = vld [vmem:[#allocation3 + $0x18] sm:$0xff]
    %v189 = vld [vmem:[#allocation3 + $0x20] sm:$0xff]
    %v190 = vld [vmem:[#allocation3 + $0x28] sm:$0xff]
    %v191 = vld [vmem:[#allocation3 + $0x30] sm:$0xff]
    %v192 = vld [vmem:[#allocation3 + $0x38] sm:$0xff]
    %v193 = vld [vmem:[#allocation3 + $0x40] sm:$0xff]
    %v194 = vld [vmem:[#allocation3 + $0x48] sm:$0xff]
    %v195 = vld [vmem:[#allocation3 + $0x50] sm:$0xff]
    %v196 = vld [vmem:[#allocation3 + $0x58] sm:$0xff]
    %v197 = vld [vmem:[#allocation3 + $0x60] sm:$0xff]
    %v198 = vld [vmem:[#allocation3 + $0x68] sm:$0xff]
    %v199 = vld [vmem:[#allocation3 + $0x70] sm:$0xff]
    %v200 = vld [vmem:[#allocation3 + $0x78] sm:$0xff]
    %v201 = vpack.c.bf16 %v193, %v185
    %v202 = vpack.c.bf16 %v194, %v186
    %v203 = vpack.c.bf16 %v195, %v187
    %v204 = vpack.c.bf16 %v196, %v188
    %v205 = vpack.c.bf16 %v197, %v189
    %v206 = vpack.c.bf16 %v198, %v190
    %v207 = vpack.c.bf16 %v199, %v191
    %v208 = vpack.c.bf16 %v200, %v192
    %v337 = vunpack.c.l.b16 %v55
    %v338 = vunpack.c.l.b16 %v56
    %v339 = vunpack.c.l.b16 %v57
    %v340 = vunpack.c.l.b16 %v58
    %v341 = vunpack.c.l.b16 %v59
    %v342 = vunpack.c.l.b16 %v60
    %v343 = vunpack.c.l.b16 %v61
    %v344 = vunpack.c.l.b16 %v62
    %v345 = vunpack.c.l.b16 %v63
    %v346 = vunpack.c.l.b16 %v64
    %v347 = vunpack.c.l.b16 %v65
    %v348 = vunpack.c.l.b16 %v66
    %v349 = vunpack.c.l.b16 %v67
    %v350 = vunpack.c.l.b16 %v68
    %v351 = vunpack.c.l.b16 %v69
    %v352 = vunpack.c.l.b16 %v70
    %v353 = vunpack.c.l.b16 %v71
    %v354 = vunpack.c.l.b16 %v72
    %v355 = vunpack.c.l.b16 %v73
    %v356 = vunpack.c.l.b16 %v74
    %v357 = vunpack.c.l.b16 %v75
    %v358 = vunpack.c.l.b16 %v76
    %v359 = vunpack.c.l.b16 %v77
    %v360 = vunpack.c.l.b16 %v78
    %v361 = vunpack.c.l.b16 %v79
    %v362 = vunpack.c.l.b16 %v80
    %v363 = vunpack.c.l.b16 %v81
    %v364 = vunpack.c.l.b16 %v82
    %v365 = vunpack.c.l.b16 %v83
    %v366 = vunpack.c.l.b16 %v84
    %v367 = vunpack.c.l.b16 %v85
    %v368 = vunpack.c.l.b16 %v86
    %v369 = vunpack.c.l.b16 %v87
    %v370 = vunpack.c.l.b16 %v88
    %v371 = vunpack.c.l.b16 %v89
    %v372 = vunpack.c.l.b16 %v90
    %v373 = vunpack.c.l.b16 %v91
    %v374 = vunpack.c.l.b16 %v92
    %v375 = vunpack.c.l.b16 %v93
    %v376 = vunpack.c.l.b16 %v94
    %v377 = vunpack.c.l.b16 %v95
    %v378 = vunpack.c.l.b16 %v96
    %v379 = vunpack.c.l.b16 %v97
    %v380 = vunpack.c.l.b16 %v98
    %v381 = vunpack.c.l.b16 %v99
    %v382 = vunpack.c.l.b16 %v100
    %v383 = vunpack.c.l.b16 %v101
    %v384 = vunpack.c.l.b16 %v102
    %v385 = vunpack.c.l.b16 %v103
    %v386 = vunpack.c.l.b16 %v104
    %v387 = vunpack.c.l.b16 %v105
    %v388 = vunpack.c.l.b16 %v106
    %v389 = vunpack.c.l.b16 %v107
    %v390 = vunpack.c.l.b16 %v108
    %v391 = vunpack.c.l.b16 %v109
    %v392 = vunpack.c.l.b16 %v110
    %v393 = vunpack.c.l.b16 %v111
    %v394 = vunpack.c.l.b16 %v112
    %v395 = vunpack.c.l.b16 %v113
    %v396 = vunpack.c.l.b16 %v114
    %v397 = vunpack.c.l.b16 %v115
    %v398 = vunpack.c.l.b16 %v116
    %v399 = vunpack.c.l.b16 %v117
    %v400 = vunpack.c.l.b16 %v118
    %v401 = vunpack.c.l.b16 %v119
    %v402 = vunpack.c.l.b16 %v120
    %v403 = vunpack.c.l.b16 %v121
    %v404 = vunpack.c.l.b16 %v122
    %v405 = vunpack.c.l.b16 %v123
    %v406 = vunpack.c.l.b16 %v124
    %v407 = vunpack.c.l.b16 %v125
    %v408 = vunpack.c.l.b16 %v126
    %v409 = vunpack.c.l.b16 %v127
    %v410 = vunpack.c.l.b16 %v128
    %v411 = vunpack.c.l.b16 %v129
    %v412 = vunpack.c.l.b16 %v130
    %v413 = vunpack.c.l.b16 %v131
    %v414 = vunpack.c.l.b16 %v132
    %v415 = vunpack.c.l.b16 %v133
    %v416 = vunpack.c.l.b16 %v134
    %v417 = vunpack.c.l.b16 %v135
    %v418 = vunpack.c.l.b16 %v136
    %v419 = vunpack.c.l.b16 %v137
    %v420 = vunpack.c.l.b16 %v138
    %v421 = vunpack.c.l.b16 %v139
    %v422 = vunpack.c.l.b16 %v140
    %v423 = vunpack.c.l.b16 %v141
    %v424 = vunpack.c.l.b16 %v142
    %v425 = vunpack.c.l.b16 %v143
    %v426 = vunpack.c.l.b16 %v144
    %v427 = vunpack.c.l.b16 %v145
    %v428 = vunpack.c.l.b16 %v146
    %v429 = vunpack.c.l.b16 %v147
    %v430 = vunpack.c.l.b16 %v148
    %v431 = vunpack.c.l.b16 %v149
    %v432 = vunpack.c.l.b16 %v150
    %v433 = vunpack.c.l.b16 %v151
    %v434 = vunpack.c.l.b16 %v152
    %v435 = vunpack.c.l.b16 %v153
    %v436 = vunpack.c.l.b16 %v154
    %v437 = vunpack.c.l.b16 %v155
    %v438 = vunpack.c.l.b16 %v156
    %v439 = vunpack.c.l.b16 %v157
    %v440 = vunpack.c.l.b16 %v158
    %v441 = vunpack.c.l.b16 %v159
    %v442 = vunpack.c.l.b16 %v160
    %v443 = vunpack.c.l.b16 %v161
    %v444 = vunpack.c.l.b16 %v162
    %v445 = vunpack.c.l.b16 %v163
    %v446 = vunpack.c.l.b16 %v164
    %v447 = vunpack.c.l.b16 %v165
    %v448 = vunpack.c.l.b16 %v166
    %v449 = vunpack.c.l.b16 %v167
    %v450 = vunpack.c.l.b16 %v168
    %v451 = vunpack.c.l.b16 %v169
    %v452 = vunpack.c.l.b16 %v170
    %v453 = vunpack.c.l.b16 %v171
    %v454 = vunpack.c.l.b16 %v172
    %v455 = vunpack.c.l.b16 %v173
    %v456 = vunpack.c.l.b16 %v174
    %v457 = vunpack.c.l.b16 %v175
    %v458 = vunpack.c.l.b16 %v176
    %v459 = vunpack.c.l.b16 %v177
    %v460 = vunpack.c.l.b16 %v178
    %v461 = vunpack.c.l.b16 %v179
    %v462 = vunpack.c.l.b16 %v180
    %v463 = vunpack.c.l.b16 %v181
    %v464 = vunpack.c.l.b16 %v182
    %v465 = vpack.c.b16 %v338, %v337
    %v466 = vpack.c.b16 %v340, %v339
    %v467 = vpack.c.b16 %v342, %v341
    %v468 = vpack.c.b16 %v344, %v343
    %v469 = vpack.c.b16 %v346, %v345
    %v470 = vpack.c.b16 %v348, %v347
    %v471 = vpack.c.b16 %v350, %v349
    %v472 = vpack.c.b16 %v352, %v351
    %v473 = vpack.c.b16 %v354, %v353
    %v474 = vpack.c.b16 %v356, %v355
    %v475 = vpack.c.b16 %v358, %v357
    %v476 = vpack.c.b16 %v360, %v359
    %v477 = vpack.c.b16 %v362, %v361
    %v478 = vpack.c.b16 %v364, %v363
    %v479 = vpack.c.b16 %v366, %v365
    %v480 = vpack.c.b16 %v368, %v367
    %v481 = vpack.c.b16 %v370, %v369
    %v482 = vpack.c.b16 %v372, %v371
    %v483 = vpack.c.b16 %v374, %v373
    %v484 = vpack.c.b16 %v376, %v375
    %v485 = vpack.c.b16 %v378, %v377
    %v486 = vpack.c.b16 %v380, %v379
    %v487 = vpack.c.b16 %v382, %v381
    %v488 = vpack.c.b16 %v384, %v383
    %v489 = vpack.c.b16 %v386, %v385
    %v490 = vpack.c.b16 %v388, %v387
    %v491 = vpack.c.b16 %v390, %v389
    %v492 = vpack.c.b16 %v392, %v391
    %v493 = vpack.c.b16 %v394, %v393
    %v494 = vpack.c.b16 %v396, %v395
    %v495 = vpack.c.b16 %v398, %v397
    %v496 = vpack.c.b16 %v400, %v399
    %v497 = vpack.c.b16 %v402, %v401
    %v498 = vpack.c.b16 %v404, %v403
    %v499 = vpack.c.b16 %v406, %v405
    %v500 = vpack.c.b16 %v408, %v407
    %v501 = vpack.c.b16 %v410, %v409
    %v502 = vpack.c.b16 %v412, %v411
    %v503 = vpack.c.b16 %v414, %v413
    %v504 = vpack.c.b16 %v416, %v415
    %v505 = vpack.c.b16 %v418, %v417
    %v506 = vpack.c.b16 %v420, %v419
    %v507 = vpack.c.b16 %v422, %v421
    %v508 = vpack.c.b16 %v424, %v423
    %v509 = vpack.c.b16 %v426, %v425
    %v510 = vpack.c.b16 %v428, %v427
    %v511 = vpack.c.b16 %v430, %v429
    %v512 = vpack.c.b16 %v432, %v431
    %v513 = vpack.c.b16 %v434, %v433
    %v514 = vpack.c.b16 %v436, %v435
    %v515 = vpack.c.b16 %v438, %v437
    %v516 = vpack.c.b16 %v440, %v439
    %v517 = vpack.c.b16 %v442, %v441
    %v518 = vpack.c.b16 %v444, %v443
    %v519 = vpack.c.b16 %v446, %v445
    %v520 = vpack.c.b16 %v448, %v447
    %v521 = vpack.c.b16 %v450, %v449
    %v522 = vpack.c.b16 %v452, %v451
    %v523 = vpack.c.b16 %v454, %v453
    %v524 = vpack.c.b16 %v456, %v455
    %v525 = vpack.c.b16 %v458, %v457
    %v526 = vpack.c.b16 %v460, %v459
    %v527 = vpack.c.b16 %v462, %v461
    %v528 = vpack.c.b16 %v464, %v463
    %593 = vmatprep.subr.bf16.mxu0 0
    %594 = vmatpush1.bf16.msra.mxu0 %v465
    %595 = vmatprep.subr.bf16.mxu0 0
    %596 = vmatpush1.bf16.msra.mxu0 %v466
    %597 = vmatprep.subr.bf16.mxu0 0
    %598 = vmatpush1.bf16.msra.mxu0 %v467
    %599 = vmatprep.subr.bf16.mxu0 0
    %600 = vmatpush1.bf16.msra.mxu0 %v468
    %601 = vmatprep.subr.bf16.mxu0 0
    %602 = vmatpush1.bf16.msra.mxu0 %v469
    %603 = vmatprep.subr.bf16.mxu0 0
    %604 = vmatpush1.bf16.msra.mxu0 %v470
    %605 = vmatprep.subr.bf16.mxu0 0
    %606 = vmatpush1.bf16.msra.mxu0 %v471
    %607 = vmatprep.subr.bf16.mxu0 0
    %608 = vmatpush1.bf16.msra.mxu0 %v472
    %609 = vmatprep.subr.bf16.mxu0 0
    %610 = vmatpush1.bf16.msra.mxu0 %v473
    %611 = vmatprep.subr.bf16.mxu0 0
    %612 = vmatpush1.bf16.msra.mxu0 %v474
    %613 = vmatprep.subr.bf16.mxu0 0
    %614 = vmatpush1.bf16.msra.mxu0 %v475
    %615 = vmatprep.subr.bf16.mxu0 0
    %616 = vmatpush1.bf16.msra.mxu0 %v476
    %617 = vmatprep.subr.bf16.mxu0 0
    %618 = vmatpush1.bf16.msra.mxu0 %v477
    %619 = vmatprep.subr.bf16.mxu0 0
    %620 = vmatpush1.bf16.msra.mxu0 %v478
    %621 = vmatprep.subr.bf16.mxu0 0
    %622 = vmatpush1.bf16.msra.mxu0 %v479
    %623 = vmatprep.subr.bf16.mxu0 0
    %624 = vmatpush1.bf16.msra.mxu0 %v480
    %625 = vmatprep.mubr.bf16.mxu0 %v202
    %626 = vmatmul.mubr.bf16.gmra.mrb[0].mxu0 %v201
    %v627 = vpop.f32.mrb[0].mxu0
    %v628 = vadd.f32 0.0, %v627
    %v629 = vpop.f32.mrb[0].mxu0
    %v630 = vpop.f32.mrb[0].mxu0
    %v631 = vadd.f32 0.0, %v630
    %v632 = vpop.f32.mrb[0].mxu0
    %633 = vdwg.mxu0
    %634 = vmatprep.subr.bf16.mxu0 0
    %635 = vmatpush1.bf16.msra.mxu0 %v481
    %636 = vmatprep.subr.bf16.mxu0 0
    %637 = vmatpush1.bf16.msra.mxu0 %v482
    %638 = vmatprep.subr.bf16.mxu0 0
    %639 = vmatpush1.bf16.msra.mxu0 %v483
    %640 = vmatprep.subr.bf16.mxu0 0
    %641 = vmatpush1.bf16.msra.mxu0 %v484
    %642 = vmatprep.subr.bf16.mxu0 0
    %643 = vmatpush1.bf16.msra.mxu0 %v485
    %644 = vmatprep.subr.bf16.mxu0 0
    %645 = vmatpush1.bf16.msra.mxu0 %v486
    %646 = vmatprep.subr.bf16.mxu0 0
    %647 = vmatpush1.bf16.msra.mxu0 %v487
    %648 = vmatprep.subr.bf16.mxu0 0
    %649 = vmatpush1.bf16.msra.mxu0 %v488
    %650 = vmatprep.subr.bf16.mxu0 0
    %651 = vmatpush1.bf16.msra.mxu0 %v489
    %652 = vmatprep.subr.bf16.mxu0 0
    %653 = vmatpush1.bf16.msra.mxu0 %v490
    %654 = vmatprep.subr.bf16.mxu0 0
    %655 = vmatpush1.bf16.msra.mxu0 %v491
    %656 = vmatprep.subr.bf16.mxu0 0
    %657 = vmatpush1.bf16.msra.mxu0 %v492
    %658 = vmatprep.subr.bf16.mxu0 0
    %659 = vmatpush1.bf16.msra.mxu0 %v493
    %660 = vmatprep.subr.bf16.mxu0 0
    %661 = vmatpush1.bf16.msra.mxu0 %v494
    %662 = vmatprep.subr.bf16.mxu0 0
    %663 = vmatpush1.bf16.msra.mxu0 %v495
    %664 = vmatprep.subr.bf16.mxu0 0
    %665 = vmatpush1.bf16.msra.mxu0 %v496
    %666 = vmatprep.mubr.bf16.mxu0 %v204
    %667 = vmatmul.mubr.bf16.gmra.mrb[0].mxu0 %v203
    %v668 = vpop.f32.mrb[0].mxu0
    %v669 = vadd.f32 %v628, %v668
    %v670 = vpop.f32.mrb[0].mxu0
    %v671 = vpop.f32.mrb[0].mxu0
    %v672 = vadd.f32 %v631, %v671
    %v673 = vpop.f32.mrb[0].mxu0
    %674 = vdwg.mxu0
    %675 = vmatprep.subr.bf16.mxu0 0
    %676 = vmatpush1.bf16.msra.mxu0 %v497
    %677 = vmatprep.subr.bf16.mxu0 0
    %678 = vmatpush1.bf16.msra.mxu0 %v498
    %679 = vmatprep.subr.bf16.mxu0 0
    %680 = vmatpush1.bf16.msra.mxu0 %v499
    %681 = vmatprep.subr.bf16.mxu0 0
    %682 = vmatpush1.bf16.msra.mxu0 %v500
    %683 = vmatprep.subr.bf16.mxu0 0
    %684 = vmatpush1.bf16.msra.mxu0 %v501
    %685 = vmatprep.subr.bf16.mxu0 0
    %686 = vmatpush1.bf16.msra.mxu0 %v502
    %687 = vmatprep.subr.bf16.mxu0 0
    %688 = vmatpush1.bf16.msra.mxu0 %v503
    %689 = vmatprep.subr.bf16.mxu0 0
    %690 = vmatpush1.bf16.msra.mxu0 %v504
    %691 = vmatprep.subr.bf16.mxu0 0
    %692 = vmatpush1.bf16.msra.mxu0 %v505
    %693 = vmatprep.subr.bf16.mxu0 0
    %694 = vmatpush1.bf16.msra.mxu0 %v506
    %695 = vmatprep.subr.bf16.mxu0 0
    %696 = vmatpush1.bf16.msra.mxu0 %v507
    %697 = vmatprep.subr.bf16.mxu0 0
    %698 = vmatpush1.bf16.msra.mxu0 %v508
    %699 = vmatprep.subr.bf16.mxu0 0
    %700 = vmatpush1.bf16.msra.mxu0 %v509
    %701 = vmatprep.subr.bf16.mxu0 0
    %702 = vmatpush1.bf16.msra.mxu0 %v510
    %703 = vmatprep.subr.bf16.mxu0 0
    %704 = vmatpush1.bf16.msra.mxu0 %v511
    %705 = vmatprep.subr.bf16.mxu0 0
    %706 = vmatpush1.bf16.msra.mxu0 %v512
    %707 = vmatprep.mubr.bf16.mxu0 %v206
    %708 = vmatmul.mubr.bf16.gmra.mrb[0].mxu0 %v205
    %v709 = vpop.f32.mrb[0].mxu0
    %v710 = vadd.f32 %v669, %v709
    %v711 = vpop.f32.mrb[0].mxu0
    %v712 = vpop.f32.mrb[0].mxu0
    %v713 = vadd.f32 %v672, %v712
    %v714 = vpop.f32.mrb[0].mxu0
    %715 = vdwg.mxu0
    %716 = vmatprep.subr.bf16.mxu0 0
    %717 = vmatpush1.bf16.msra.mxu0 %v513
    %718 = vmatprep.subr.bf16.mxu0 0
    %719 = vmatpush1.bf16.msra.mxu0 %v514
    %720 = vmatprep.subr.bf16.mxu0 0
    %721 = vmatpush1.bf16.msra.mxu0 %v515
    %722 = vmatprep.subr.bf16.mxu0 0
    %723 = vmatpush1.bf16.msra.mxu0 %v516
    %724 = vmatprep.subr.bf16.mxu0 0
    %725 = vmatpush1.bf16.msra.mxu0 %v517
    %726 = vmatprep.subr.bf16.mxu0 0
    %727 = vmatpush1.bf16.msra.mxu0 %v518
    %728 = vmatprep.subr.bf16.mxu0 0
    %729 = vmatpush1.bf16.msra.mxu0 %v519
    %730 = vmatprep.subr.bf16.mxu0 0
    %731 = vmatpush1.bf16.msra.mxu0 %v520
    %732 = vmatprep.subr.bf16.mxu0 0
    %733 = vmatpush1.bf16.msra.mxu0 %v521
    %734 = vmatprep.subr.bf16.mxu0 0
    %735 = vmatpush1.bf16.msra.mxu0 %v522
    %736 = vmatprep.subr.bf16.mxu0 0
    %737 = vmatpush1.bf16.msra.mxu0 %v523
    %738 = vmatprep.subr.bf16.mxu0 0
    %739 = vmatpush1.bf16.msra.mxu0 %v524
    %740 = vmatprep.subr.bf16.mxu0 0
    %741 = vmatpush1.bf16.msra.mxu0 %v525
    %742 = vmatprep.subr.bf16.mxu0 0
    %743 = vmatpush1.bf16.msra.mxu0 %v526
    %744 = vmatprep.subr.bf16.mxu0 0
    %745 = vmatpush1.bf16.msra.mxu0 %v527
    %746 = vmatprep.subr.bf16.mxu0 0
    %747 = vmatpush1.bf16.msra.mxu0 %v528
    %748 = vmatprep.mubr.bf16.mxu0 %v208
    %749 = vmatmul.mubr.bf16.gmra.mrb[0].mxu0 %v207
    %v750 = vpop.f32.mrb[0].mxu0
    %v751 = vadd.f32 %v710, %v750
    %v752 = vpop.f32.mrb[0].mxu0
    %v753 = vpop.f32.mrb[0].mxu0
    %v754 = vadd.f32 %v713, %v753
    %v755 = vpop.f32.mrb[0].mxu0
    %756 = vdwg.mxu0
    %v757 = vadd.f32 %v183, %v751
    %v758 = vadd.f32 %v184, %v754
    %759 = vst [vmem:[#allocation2] sm:$0xff] %v757
    %760 = vst [vmem:[#allocation2 + $0x8] sm:$0xff] %v758
    // Predicated region
    $region26: #{tpu_custom_call.1} parent=1 // pred_check
      %p761 = pneg %p44
    $region27: #{tpu_custom_call.1} parent=1 // pred_check_branch
      %763 = sbr.rel (%p761) target = $region29
    $region28: #{tpu_custom_call.1} parent=1 // pred_region
      %v764 = vld [vmem:[#allocation2] sm:$0xff]
      %v765 = vld [vmem:[#allocation2 + $0x8] sm:$0xff]
      %v766 = vld [vmem:[%s2] sm:$0x1]
      %v768 = vlaneseq
      %v769 = vshrl.u32 %v768, 7
      %v770 = vsub.s32 0, %v769
      %v771 = vrot.slane %v766, %v770
      %v773 = vadd.f32 %v764, %v771
      %v774 = vadd.f32 %v765, %v771
      %775 = vst [vmem:[#allocation2] sm:$0xff] %v773
      %776 = vst [vmem:[#allocation2 + $0x8] sm:$0xff] %v774
      %v777 = vld [vmem:[#allocation2] sm:$0xff]
      %v778 = vld [vmem:[#allocation2 + $0x8] sm:$0xff]
      %779 = vmax.xlane.f32.xlu0 %v777
      %v780 = vpop.xlane.xlu0 %779
      %781 = vmax.xlane.f32.xlu0 %v778
      %v782 = vpop.xlane.xlu0 %781
      %v783 = vsub.f32 %v777, %v780
      %v784 = vsub.f32 %v778, %v782
      %v785 = vmul.f32 %v783, 1.442695
      %v786 = vpow.pop %v785
      %v787 = vmul.f32 %v784, 1.442695
      %v788 = vpow.pop %v787
      %789 = vst [vmem:[#allocation2] sm:$0xff] %v786
      %790 = vst [vmem:[#allocation2 + $0x8] sm:$0xff] %v788
      %v791 = vld [vmem:[#allocation2] sm:$0xff]
      %v792 = vld [vmem:[#allocation2 + $0x8] sm:$0xff]
      %793 = vadd.xlane.f32.xlu0 %v791
      %v794 = vpop.xlane.xlu0 %793
      %795 = vadd.xlane.f32.xlu0 %v792
      %v796 = vpop.xlane.xlu0 %795
      %v797 = vrcp.pop %v794
      %v798 = vrcp.pop %v796
      %v799 = vmul.f32 %v791, %v797
      %v800 = vmul.f32 %v792, %v798
      %801 = vst [vmem:[#allocation8] sm:$0xff] %v799
      %802 = vst [vmem:[#allocation8 + $0x8] sm:$0xff] %v800
    $region29: #{tpu_custom_call.1} parent=1 // pred_fallthru
      _
    // Predicated region
    $region30: #{tpu_custom_call.1} parent=1 // pred_check
      _
    $region31: #{tpu_custom_call.1} parent=1 // pred_check_branch
      %804 = sbr.rel (0) target = $region33
    $region32: #{tpu_custom_call.1} parent=1 // pred_region
      %s806 = ssub.s32 256, 256
      %807 = vsyncadd [#allocation5], %s806
      %s808 = sshll.u32 [#allocation8], 4
      %s809 = int_to_ptr.vmem [resolvable:$true] %s808
      %814 = dma.vmem_to_hbm [thread:$0]  %s809, 256, %s3, [#allocation5], 128, 128, 8
    $region33: #{tpu_custom_call.1} parent=1 // pred_fallthru
      _
    // Predicated region
    $region34: #{tpu_custom_call.1} parent=1 // pred_check
      _
    $region35: #{tpu_custom_call.1} parent=1 // pred_check_branch
      %816 = sbr.rel (0) target = $region37
    $region36: #{tpu_custom_call.1} parent=1 // pred_region
      %817 = dma.done [#allocation5], 256
    $region37: #{tpu_custom_call.1} parent=1 // pred_fallthru
      _
    %818 = vsyncpa [#allocation4], 1
    %819 = vsyncpa [#allocation7], 1
    %820 = vsyncpa [#allocation5], 1

</llo_original>
